<compile_context>
chip_gen: v7x
topology: tpu7x:2x2x1
jax: 0.10.0
libtpu: 0.0.40
codegen_flags: <defaults>
</compile_context>

<pallas_src>
import numpy as np
import jax
import jax.numpy as jnp
from jax import lax
from jax.experimental import pallas as pl
from jax.experimental.pallas import tpu as pltpu


# --------------------------------------------------------------------------- helpers
def _round_up(v, m):
    return ((v + m - 1) // m) * m


def _pick_row_tile(n_rows, tm_max=256):
    """Row tile: multiple of 8, <= tm_max, and (when possible) >= 2 grid steps so
    both v7x TensorCores get work (v5e/v6e single-TC: costs nothing there)."""
    tm = min(tm_max, _round_up(n_rows, 8))
    if _round_up(n_rows, tm) // tm < 2 and n_rows > 8:
        tm = _round_up(-(-n_rows // 2), 8)
    return tm


# --------------------------------------------------------------------------- dense MXU path
def _dense_matmul_kernel(u_ref, x_ref, o_ref, acc_ref):
    @pl.when(pl.program_id(2) == 0)
    def _():
        acc_ref[...] = jnp.zeros_like(acc_ref)

    acc_ref[...] += jnp.dot(u_ref[...], x_ref[...],
                            preferred_element_type=jnp.float32)

    @pl.when(pl.program_id(2) == pl.num_programs(2) - 1)
    def _():
        o_ref[...] = acc_ref[...].astype(o_ref.dtype)


def _dense_upsample(x_mat, u_dense, *, tm_max=256, tn_max=512, tk_max=512):
    """out = U @ X on the MXU. x_mat: (N_in, BC) f32; u_dense: (N_out, N_in) np f32."""
    n_out, n_in = u_dense.shape
    _, bc = x_mat.shape

    tm = _pick_row_tile(n_out, tm_max)
    tn = min(tn_max, _round_up(bc, 128))      # lane-dense output tiles
    tk = min(tk_max, _round_up(n_in, 128))
    n_out_p = _round_up(n_out, tm)
    bc_p = _round_up(bc, tn)
    n_in_p = _round_up(n_in, tk)

    u = np.zeros((n_out_p, n_in_p), np.float32)
    u[:n_out, :n_in] = u_dense
    u = jnp.asarray(u)
    x_p = x_mat
    if (n_in_p, bc_p) != x_mat.shape:
        x_p = jnp.zeros((n_in_p, bc_p), x_mat.dtype).at[:n_in, :bc].set(x_mat)

    cost = pl.CostEstimate(
        flops=2 * n_out_p * n_in_p * bc_p,
        transcendentals=0,
        bytes_accessed=(u.size + x_p.size + n_out_p * bc_p) * 4)

    out = pl.pallas_call(
        _dense_matmul_kernel,
        out_shape=jax.ShapeDtypeStruct((n_out_p, bc_p), x_mat.dtype),
        grid_spec=pltpu.PrefetchScalarGridSpec(
            num_scalar_prefetch=0,
            grid=(n_out_p // tm, bc_p // tn, n_in_p // tk),
            in_specs=[pl.BlockSpec((tm, tk), lambda i, j, k: (i, k)),
                      pl.BlockSpec((tk, tn), lambda i, j, k: (k, j))],
            out_specs=pl.BlockSpec((tm, tn), lambda i, j, k: (i, j)),
            scratch_shapes=[pltpu.VMEM((tm, tn), jnp.float32)]),
        compiler_params=pltpu.CompilerParams(
            dimension_semantics=("parallel", "parallel", "arbitrary")),
        cost_estimate=cost,
    )(u, x_p)
    return out[:n_out, :bc]


# --------------------------------------------------------------------------- sparse ELL path
def _make_sparse_kernel(tm, k_nnz, tn):
    groups = tm // 8

    def kernel(cols_ref, vals_ref, x_ref, o_ref, gbuf):
        # cols_ref : SMEM int32 (n_out_pad * K,)  row-major (row, slot) ELL columns
        # vals_ref : VMEM f32   (tm, K)           ELL weights for this row tile
        # x_ref    : VMEM f32   (N_in, tn)        dense-operand BC chunk (constant over rows)
        # o_ref    : VMEM f32   (tm, tn)          output tile
        # gbuf     : VMEM f32   (8, tn)           gathered-row staging buffer
        base = pl.program_id(1) * tm

        def group_body(g, carry):
            row0 = pl.multiple_of(g * 8, 8)
            acc = jnp.zeros((8, tn), jnp.float32)
            for k in range(k_nnz):
                # gather the 8 source rows of this nnz slot into one (8, tn) block
                for s in range(8):
                    j = cols_ref[(base + row0 + s) * k_nnz + k]
                    gbuf[pl.ds(s, 1), :] = x_ref[pl.ds(j, 1), :]
                w = vals_ref[pl.ds(row0, 8), pl.ds(k, 1)]            # (8, 1) lane broadcast
                acc = acc + w * gbuf[...]
            o_ref[pl.ds(row0, 8), :] = acc.astype(o_ref.dtype)       # one full-width store
            return carry

        lax.fori_loop(0, groups, group_body, 0, unroll=False)

    return kernel


def _sparse_upsample(x_mat, ell_cols, ell_vals, *, tm_max=256, tn_max=512):
    """out[i, :] = sum_k vals[i, k] * X[cols[i, k], :] (ELL gather-accumulate)."""
    n_in, bc = x_mat.shape
    n_out, k_nnz = ell_cols.shape

    tm = _pick_row_tile(n_out, tm_max)
    tn = min(tn_max, _round_up(bc, 128))
    n_out_p = _round_up(n_out, tm)
    bc_p = _round_up(bc, tn)

    cols = np.zeros((n_out_p, k_nnz), np.int32)
    cols[:n_out] = ell_cols
    vals = np.zeros((n_out_p, k_nnz), np.float32)
    vals[:n_out] = ell_vals
    cols_flat = jnp.asarray(cols.reshape(-1))       # 1D SMEM: no 8-sublane padding waste
    vals_j = jnp.asarray(vals)

    x_p = x_mat
    if bc_p != bc:
        x_p = jnp.zeros((n_in, bc_p), x_mat.dtype).at[:, :bc].set(x_mat)

    cost = pl.CostEstimate(
        flops=2 * k_nnz * n_out_p * bc_p,
        transcendentals=0,
        bytes_accessed=(n_in * bc_p + n_out_p * bc_p + 2 * n_out_p * k_nnz) * 4)

    out = pl.pallas_call(
        _make_sparse_kernel(tm, k_nnz, tn),
        out_shape=jax.ShapeDtypeStruct((n_out_p, bc_p), x_mat.dtype),
        grid_spec=pltpu.PrefetchScalarGridSpec(
            num_scalar_prefetch=0,
            grid=(bc_p // tn, n_out_p // tm),        # BC chunks outer, row tiles inner
            in_specs=[
                pl.BlockSpec(memory_space=pltpu.MemorySpace.SMEM),   # flattened ELL cols
                pl.BlockSpec((tm, k_nnz), lambda j, i: (i, 0)),      # ELL vals, per-tile VMEM
                pl.BlockSpec((n_in, tn), lambda j, i: (0, j)),       # X chunk, constant over i
            ],
            out_specs=pl.BlockSpec((tm, tn), lambda j, i: (i, j)),
            scratch_shapes=[pltpu.VMEM((8, tn), jnp.float32)]),
        compiler_params=pltpu.CompilerParams(
            dimension_semantics=("parallel", "parallel")),
        cost_estimate=cost,
    )(cols_flat, vals_j, x_p)
    # TODO(synk): for extremely large N_in, also tile the (N_in, tn) X chunk along
    # N_in (extra reduction grid axis) instead of keeping it resident per step.
    # TODO(synk): for very large N_out, tile the flattened ELL cols table per row
    # tile instead of holding the whole 1D array in SMEM.
    return out[:n_out, :bc]


# --------------------------------------------------------------------------- host-side prep
def coo_to_ell(index, value, n_out):
    """Pack COO (row, col, val) into ELL (n_out, K) tables, zero-padded."""
    rows = np.asarray(index[0])
    cols = np.asarray(index[1])
    vals = np.asarray(value, np.float32)
    counts = np.bincount(rows, minlength=n_out)
    k_max = max(int(counts.max()) if counts.size else 0, 1)
    ell_cols = np.zeros((n_out, k_max), np.int32)
    ell_vals = np.zeros((n_out, k_max), np.float32)
    slot = np.zeros(n_out, np.int64)
    for r, c, v in zip(rows, cols, vals):
        s = slot[r]
        ell_cols[r, s] = c
        ell_vals[r, s] = v
        slot[r] += 1
    return ell_cols, ell_vals


def coma_upsample_forward(x, index, value, up_shape, *, method="auto"):
    """ComaUpsample.forward. x: (B, N_in, C); index/value: COO buffers of the
    (N_out, N_in) upsampling matrix; up_shape = (N_out, N_in). Returns (B, N_out, C)."""
    n_out, n_in = up_shape
    B, n_in_x, C = x.shape
    assert n_in_x == n_in
    bc = B * C

    # glue: x.permute(1,0,2).reshape(N_in, B*C) — puts B*C on the lane axis.
    x_mat = jnp.transpose(jnp.asarray(x, jnp.float32), (1, 0, 2)).reshape(n_in, bc)

    if method == "auto":
        # Dense MXU path while densified U stays modest in HBM; the sparse gather
        # path only wins for very large U (especially on v5e's slower HBM).
        method = "dense" if n_out * n_in * 4 <= (128 << 20) else "sparse"

    if method == "dense":
        u = np.zeros((n_out, n_in), np.float32)
        np.add.at(u, (np.asarray(index[0]), np.asarray(index[1])),
                  np.asarray(value, np.float32))
        out_mat = _dense_upsample(x_mat, u)
    else:
        ell_cols, ell_vals = coo_to_ell(index, value, n_out)
        out_mat = _sparse_upsample(x_mat, ell_cols, ell_vals)

    # glue: (N_out, B*C) -> (N_out, B, C) -> (B, N_out, C)
    return jnp.transpose(out_mat.reshape(n_out, B, C), (1, 0, 2))


def make_synthetic_up_matrix(n_out, n_in):
    """Deterministic synthetic COO upsampling matrix (like COMA barycentric
    upsampling: each output vertex interpolates two input vertices)."""
    rows = np.repeat(np.arange(n_out), 2)
    cols = np.stack(
        [np.arange(n_out) % n_in, (np.arange(n_out) + 1) % n_in], axis=1
    ).reshape(-1)
    vals = np.stack(
        [0.25 + 0.5 * (np.arange(n_out) % 3) / 2.0,
         0.75 - 0.5 * (np.arange(n_out) % 3) / 2.0],
        axis=1,
    ).reshape(-1).astype(np.float32)
    index = np.stack([rows, cols]).astype(np.int32)    # module buffer 'index' (2, nnz)
    value = vals                                       # module buffer 'value' (nnz,)
    return index, value


if __name__ == "__main__":
    # Two small cases: B*C = 128 (lane-dense) and a COMA-like C=3 / ragged-N_out case
    # that exercises the wrapper's lane / row padding on both paths.
    cases = [(2, 64, 64, 256),    # (B, C, N_in, N_out)
             (2, 3, 64, 200)]
    keys = jax.random.split(jax.random.PRNGKey(0), len(cases))

    for (B, C, n_in, n_out), k in zip(cases, keys):
        index, value = make_synthetic_up_matrix(n_out, n_in)
        x = jax.random.normal(k, (B, n_in, C), dtype=jnp.float32)

        # float64 host reference of the dense spmm semantics (handles duplicate coords).
        u64 = np.zeros((n_out, n_in), np.float64)
        np.add.at(u64, (index[0], index[1]), value.astype(np.float64))
        ref = np.einsum("oj,bjc->boc", u64, np.asarray(x, np.float64))

        out_dense = jax.block_until_ready(
            coma_upsample_forward(x, index, value, (n_out, n_in), method="dense"))
        out_sparse = jax.block_until_ready(
            coma_upsample_forward(x, index, value, (n_out, n_in), method="sparse"))

        assert out_dense.shape == (B, n_out, C)
        assert out_sparse.shape == (B, n_out, C)
        # Sparse path is pure f32 VPU math -> tight check.
        np.testing.assert_allclose(np.asarray(out_sparse, np.float64), ref,
                                   rtol=1e-5, atol=1e-6)
        # Dense path runs on the MXU; f32 matmuls may be evaluated via bf16 passes
        # depending on generation / precision defaults, so use a looser tolerance
        # (any indexing/layout bug would show up as O(1) error).
        np.testing.assert_allclose(np.asarray(out_dense, np.float64), ref,
                                   rtol=1e-2, atol=1e-2)

    print("KERNEL_OK")
</pallas_src>

<mosaic_0001>
module attributes {stable_mosaic.version = 11 : i64} {
  func.func @_dense_matmul_kernel(%arg0: i32, %arg1: i32, %arg2: i32, %arg3: memref<128x128xf32, #tpu.memory_space<vmem>>, %arg4: memref<128x128xf32, #tpu.memory_space<vmem>>, %arg5: memref<128x128xf32, #tpu.memory_space<vmem>>, %arg6: memref<128x128xf32, #tpu.memory_space<vmem>>) attributes {dimension_semantics = [#tpu.dimension_semantics<parallel>, #tpu.dimension_semantics<parallel>, #tpu.dimension_semantics<arbitrary>], iteration_bounds = array<i64: 2, 1, 1>, scalar_prefetch = 0 : i64, scratch_operands = 1 : i64, tpu.core_type = #tpu.core_type<tc>, window_params = [{transform_indices = @transform_0, window_bounds = array<i64: 128, 128>}, {transform_indices = @transform_1, window_bounds = array<i64: 128, 128>}, {transform_indices = @transform_2, window_bounds = array<i64: 128, 128>}]} {
    %c0_i32 = arith.constant 0 : i32
    %0 = arith.cmpi eq, %arg2, %c0_i32 : i32
    %1 = arith.extui %0 : i1 to i32
    %c0_i32_0 = arith.constant 0 : i32
    %2 = arith.cmpi ne, %1, %c0_i32_0 : i32
    scf.if %2 {
      %cst_10 = arith.constant 0.000000e+00 : f32
      %12 = vector.broadcast %cst_10 : f32 to vector<128x128xf32>
      %c0_11 = arith.constant 0 : index
      %c0_12 = arith.constant 0 : index
      %13 = vector.load %arg6[%c0_11, %c0_12] : memref<128x128xf32, #tpu.memory_space<vmem>>, vector<128x128xf32>
      tpu.vector_store %arg6[%c0_11, %c0_12], %12 {strides = array<i32>} : memref<128x128xf32, #tpu.memory_space<vmem>>, vector<128x128xf32>,
    } else {
    }
    %c0 = arith.constant 0 : index
    %c0_1 = arith.constant 0 : index
    %3 = vector.load %arg6[%c0, %c0_1] : memref<128x128xf32, #tpu.memory_space<vmem>>, vector<128x128xf32>
    %c0_2 = arith.constant 0 : index
    %c0_3 = arith.constant 0 : index
    %4 = vector.load %arg3[%c0_2, %c0_3] : memref<128x128xf32, #tpu.memory_space<vmem>>, vector<128x128xf32>
    %c0_4 = arith.constant 0 : index
    %c0_5 = arith.constant 0 : index
    %5 = vector.load %arg4[%c0_4, %c0_5] : memref<128x128xf32, #tpu.memory_space<vmem>>, vector<128x128xf32>
    %cst = arith.constant dense<0.000000e+00> : vector<128x128xf32>
    %6 = tpu.matmul %4, %5, %cst {dimension_numbers = #tpu.dot_dimension_numbers<[1], [0], [0], [1], [0, 0, 1, 1], [], []>} : vector<128x128xf32>, vector<128x128xf32>, vector<128x128xf32> -> vector<128x128xf32>
    %7 = arith.addf %3, %6 : vector<128x128xf32>
    %c0_6 = arith.constant 0 : index
    %c0_7 = arith.constant 0 : index
    %8 = vector.load %arg6[%c0_6, %c0_7] : memref<128x128xf32, #tpu.memory_space<vmem>>, vector<128x128xf32>
    tpu.vector_store %arg6[%c0_6, %c0_7], %7 {strides = array<i32>} : memref<128x128xf32, #tpu.memory_space<vmem>>, vector<128x128xf32>,
    %c0_i32_8 = arith.constant 0 : i32
    %9 = arith.cmpi eq, %arg2, %c0_i32_8 : i32
    %10 = arith.extui %9 : i1 to i32
    %c0_i32_9 = arith.constant 0 : i32
    %11 = arith.cmpi ne, %10, %c0_i32_9 : i32
    scf.if %11 {
      %c0_10 = arith.constant 0 : index
      %c0_11 = arith.constant 0 : index
      %12 = vector.load %arg6[%c0_10, %c0_11] : memref<128x128xf32, #tpu.memory_space<vmem>>, vector<128x128xf32>
      %c0_12 = arith.constant 0 : index
      %c0_13 = arith.constant 0 : index
      %13 = vector.load %arg5[%c0_12, %c0_13] : memref<128x128xf32, #tpu.memory_space<vmem>>, vector<128x128xf32>
      tpu.vector_store %arg5[%c0_12, %c0_13], %12 {strides = array<i32>} : memref<128x128xf32, #tpu.memory_space<vmem>>, vector<128x128xf32>,
    } else {
    }
    return
  }
  func.func @transform_0(%arg0: i32, %arg1: i32, %arg2: i32) -> (i32, i32) {
    %c0_i32 = arith.constant 0 : i32
    return %arg0, %arg2 : i32, i32
  }
  func.func @transform_1(%arg0: i32, %arg1: i32, %arg2: i32) -> (i32, i32) {
    %c0_i32 = arith.constant 0 : i32
    return %arg2, %arg1 : i32, i32
  }
  func.func @transform_2(%arg0: i32, %arg1: i32, %arg2: i32) -> (i32, i32) {
    %c0_i32 = arith.constant 0 : i32
    return %arg0, %arg1 : i32, i32
  }
}

</mosaic_0001>

<llo_original>
// kernel: tpu_custom_call.1
$region0: #{tpu_custom_call.1}
  #allocation0 [shape = 'u32[]', space=smem, size = 0x4, offset = 0x4, fixed_abs, tag = 'smem constant byte address 0x4 - core index']
  #allocation1 [shape = 'u32[144,128]{1,0:T(1,128)}', space=vmem, size = 0x12000, scoped, tag = 'internal scratch']
  #allocation2 [shape = 'f32[128,128]{1,0:T(8,128)}', space=vmem, size = 0x10000, scoped, tag = 'scratch operand']
  %s0 = inlined_call_operand.hbm [shape: f32[256,128], index: 0, kind: input, shape index: {}]
  %s1 = inlined_call_operand.hbm [shape: f32[128,128], index: 1, kind: input, shape index: {}]
  %s2 = inlined_call_operand.hbm [shape: f32[256,128], index: 2, kind: output, shape index: {}]
  %s3 = sld [smem:[#allocation0]]
  $region57: #{tpu_custom_call.1} parent=0
    _
  %s5 = ssub.s32 1, %s3
  %s6 = scalar_select 0, %s5, %s3
  $region1: #{tpu_custom_call.1} parent=0
    #allocation3 [shape = 'u8[131072]{0}', space=vmem, size = 0x20000, scoped, tag = 'input window, operand 0']
    #allocation4 [shape = 's32[2]{0}', space=sflag, size = 0x8, scoped, tag = 'scoped memory for tpu_custom_call.1']
    #allocation5 [shape = 's32[2]{0}', space=sflag, size = 0x8, scoped, tag = 'scoped memory for tpu_custom_call.1']
    #allocation6 [shape = 'u8[65536]{0}', space=vmem, size = 0x10000, scoped, tag = 'input window, operand 1, single buffered']
    #allocation7 [shape = 's32[1]{0}', space=sflag, size = 0x4, scoped, tag = 'scoped memory for tpu_custom_call.1']
    #allocation8 [shape = 'u8[131072]{0}', space=vmem, size = 0x20000, scoped, tag = 'output window, operand 0']
    %7 = vsyncpa [#allocation4], 0
    %s8 = scalar_lea.sflag [#allocation4], 1
    %9 = vsyncpa %s8, 0
    %10 = vsyncpa [#allocation7], 0
    %11 = vsyncpa [#allocation5], 0
    %s12 = scalar_lea.sflag [#allocation5], 1
    %13 = vsyncpa %s12, 0
    loop: start=0, step=1, limit=4
    $region2: #{tpu_custom_call.1} parent=1 // loop_pre_header
      _
    $region3: #{tpu_custom_call.1} parent=1 // loop_header
      %s15 = sphi 0, %s19
      %p16 = scmp.ge.s32.totalorder %s15, 4
      %s22 = sphi 0, %s41
      %s23 = sphi 0, %s37
      %s24 = sphi 0, %s33
      %s25 = sphi 0, %s22
      %s26 = sphi 0, %s23
      %s27 = sphi 0, %s24
      %s28 = sphi 0, %s25
      %s29 = sphi 0, %s26
      %s30 = sphi 0, %s27
      %s46 = sphi 0, %s48
      %s49 = sphi 0, %s46
      %s50 = sphi 0, %s49
      %s66 = sphi 0, %s50
      %s74 = sphi 0, %s76
      %s77 = sphi 0, %s74
      %s78 = sphi 0, %s77
      %s94 = sphi 0, %s78
      %s102 = sphi 0, %s104
      %s105 = sphi 0, %s102
      %s106 = sphi 0, %s105
      %s122 = sphi 0, %s106
    $region4: #{tpu_custom_call.1} parent=1 // loop_header_branch
      %18 = sbr.rel (%p16) target = $region8
    $region5: #{tpu_custom_call.1} parent=1 // loop_body
      %s20 = ssub.s32 %s15, 1
      %s21 = ssub.s32 %s15, 2
      %s31 = sadd.s32 1, %s24
      %p32 = scmp.ge.s32.totalorder %s31, 1
      %s33 = scalar_select %p32, 0, %s31
      %s34 = sadd.s32 1, %s23
      %s35 = scalar_select %p32, %s34, %s23
      %p36 = scmp.ge.s32.totalorder %s35, 1
      %s37 = scalar_select %p36, 0, %s35
      %s38 = sadd.s32 1, %s22
      %s39 = scalar_select %p36, %s38, %s22
      %p40 = scmp.ge.s32.totalorder %s39, 2
      %s41 = scalar_select %p40, 0, %s39
      %s42 = ssub.s32 %s22, %s41
      %s43 = ssub.s32 %s24, %s33
      %s44 = sor.u32 %s42, %s43
      %p45 = scmp.eq.s32.totalorder %s44, 0
      %s47 = sadd.s32 %s46, 1
      %s48 = scalar_select %p45, %s46, %s47
      %p51 = pneg %p45
      %p52 = scmp.eq.s32.totalorder %s15, 1
      %p53 = por %p51, %p52
      %p54 = scmp.ne.s32.totalorder %s46, %s49
      %p55 = scmp.eq.s32.totalorder %s15, 0
      %p56 = por %p54, %p55
      %p57 = scmp.ne.s32.totalorder %s46, %s49
      %p58 = scmp.eq.s32.totalorder %s20, 1
      %p59 = por %p57, %p58
      %p60 = scmp.ne.s32.totalorder %s49, %s50
      %p61 = scmp.eq.s32.totalorder %s20, 0
      %p62 = por %p60, %p61
      %p63 = scmp.ne.s32.totalorder %s49, %s50
      %p64 = scmp.eq.s32.totalorder %s21, 1
      %p65 = por %p63, %p64
      %p67 = scmp.ne.s32.totalorder %s50, %s66
      %p68 = scmp.eq.s32.totalorder %s21, 0
      %p69 = por %p67, %p68
      %s70 = ssub.s32 %s24, %s33
      %s71 = ssub.s32 %s23, %s37
      %s72 = sor.u32 %s70, %s71
      %p73 = scmp.eq.s32.totalorder %s72, 0
      %s75 = sadd.s32 %s74, 1
      %s76 = scalar_select %p73, %s74, %s75
      %p79 = pneg %p73
      %p80 = scmp.eq.s32.totalorder %s15, 1
      %p81 = por %p79, %p80
      %p82 = scmp.ne.s32.totalorder %s74, %s77
      %p83 = scmp.eq.s32.totalorder %s15, 0
      %p84 = por %p82, %p83
      %p85 = scmp.ne.s32.totalorder %s74, %s77
      %p86 = scmp.eq.s32.totalorder %s20, 1
      %p87 = por %p85, %p86
      %p88 = scmp.ne.s32.totalorder %s77, %s78
      %p89 = scmp.eq.s32.totalorder %s20, 0
      %p90 = por %p88, %p89
      %p91 = scmp.ne.s32.totalorder %s77, %s78
      %p92 = scmp.eq.s32.totalorder %s21, 1
      %p93 = por %p91, %p92
      %p95 = scmp.ne.s32.totalorder %s78, %s94
      %p96 = scmp.eq.s32.totalorder %s21, 0
      %p97 = por %p95, %p96
      %s98 = ssub.s32 %s22, %s41
      %s99 = ssub.s32 %s23, %s37
      %s100 = sor.u32 %s98, %s99
      %p101 = scmp.eq.s32.totalorder %s100, 0
      %s103 = sadd.s32 %s102, 1
      %s104 = scalar_select %p101, %s102, %s103
      %p107 = pneg %p101
      %p108 = scmp.eq.s32.totalorder %s15, 1
      %p109 = por %p107, %p108
      %p110 = scmp.ne.s32.totalorder %s102, %s105
      %p111 = scmp.eq.s32.totalorder %s15, 0
      %p112 = por %p110, %p111
      %p113 = scmp.ne.s32.totalorder %s102, %s105
      %p114 = scmp.eq.s32.totalorder %s20, 1
      %p115 = por %p113, %p114
      %p116 = scmp.ne.s32.totalorder %s105, %s106
      %p117 = scmp.eq.s32.totalorder %s20, 0
      %p118 = por %p116, %p117
      %p119 = scmp.ne.s32.totalorder %s105, %s106
      %p120 = scmp.eq.s32.totalorder %s21, 1
      %p121 = por %p119, %p120
      %p123 = scmp.ne.s32.totalorder %s106, %s122
      %p124 = scmp.eq.s32.totalorder %s21, 0
      %p125 = por %p123, %p124
      %p126 = scmp.le.s32.totalorder 1, %s15
      %p127 = scmp.lt.s32.totalorder %s15, 3
      %p128 = pnand %p126, %p127
      %p129 = pneg %p128
      // Predicated region
      $region9: #{tpu_custom_call.1} parent=5 // pred_check
        _
      $region10: #{tpu_custom_call.1} parent=5 // pred_check_branch
        %131 = sbr.rel (%p128) target = $region12
      $region11: #{tpu_custom_call.1} parent=5 // pred_region
        %s132 = ssub.s32 %s15, 1
        // Predicated region
        $region13: #{tpu_custom_call.1} parent=11 // pred_check
          %p133 = pneg %p90
        $region14: #{tpu_custom_call.1} parent=11 // pred_check_branch
          %135 = sbr.rel (%p133) target = $region16
        $region15: #{tpu_custom_call.1} parent=11 // pred_region
          %s136 = smul.u32 16, %s27
          %s138 = ssub.s32 2048, 2048
          %139 = vsyncadd [#allocation7], %s138
          %s140 = sadd.s32 %s26, %s136
          %s141 = smul.addr %s140, 128
          %s142 = scalar_lea.hbm %s1, %s141
          %s143 = sshll.u32 [#allocation6], 4
          %s144 = int_to_ptr.vmem [resolvable:$true] %s143
          %149 = dma.hbm_to_vmem [thread:$0]  %s142, 2048, %s144, [#allocation7], 128, 128, 8
        $region16: #{tpu_custom_call.1} parent=11 // pred_fallthru
          _
      $region12: #{tpu_custom_call.1} parent=5 // pred_fallthru
        _
      %p150 = scmp.lt.s32.totalorder %s15, 2
      // Predicated region
      $region17: #{tpu_custom_call.1} parent=5 // pred_check
        %p151 = pneg %p150
      $region18: #{tpu_custom_call.1} parent=5 // pred_check_branch
        %153 = sbr.rel (%p151) target = $region20
      $region19: #{tpu_custom_call.1} parent=5 // pred_region
        // Predicated region
        $region21: #{tpu_custom_call.1} parent=19 // pred_check
          %p154 = pneg %p56
        $region22: #{tpu_custom_call.1} parent=19 // pred_check_branch
          %156 = sbr.rel (%p154) target = $region24
        $region23: #{tpu_custom_call.1} parent=19 // pred_region
          %s157 = sand.u32 %s46, 1
          %s158 = scalar_lea.sflag [#allocation4], %s157
          %s159 = sand.u32 %s46, 1
          %s160 = smul.addr %s159, 128
          %s161 = scalar_lea.vmem [#allocation3], %s160
          %s162 = smul.u32 16, %s22
          %s164 = ssub.s32 2048, 2048
          %165 = vsyncadd %s158, %s164
          %s166 = sadd.s32 %s24, %s162
          %s167 = smul.addr %s166, 128
          %s168 = scalar_lea.hbm %s0, %s167
          %s169 = sshll.u32 %s161, 4
          %s170 = int_to_ptr.vmem [resolvable:$true] %s169
          %175 = dma.hbm_to_vmem [thread:$0]  %s168, 2048, %s170, %s158, 128, 128, 8
        $region24: #{tpu_custom_call.1} parent=19 // pred_fallthru
          _
      $region20: #{tpu_custom_call.1} parent=5 // pred_fallthru
        _
      %p176 = scmp.le.s32.totalorder 1, %s15
      %p177 = scmp.lt.s32.totalorder %s15, 3
      %p178 = pnand %p176, %p177
      %p179 = pneg %p178
      // Predicated region
      $region25: #{tpu_custom_call.1} parent=5 // pred_check
        _
      $region26: #{tpu_custom_call.1} parent=5 // pred_check_branch
        %181 = sbr.rel (%p178) target = $region28
      $region27: #{tpu_custom_call.1} parent=5 // pred_region
        %s182 = ssub.s32 %s15, 1
        %s183 = sand.u32 %s49, 1
        %s184 = scalar_lea.sflag [#allocation4], %s183
        %s185 = sand.u32 %s49, 1
        %s186 = smul.addr %s185, 128
        %s187 = scalar_lea.vmem [#allocation3], %s186
        // Predicated region
        $region29: #{tpu_custom_call.1} parent=27 // pred_check
          %p188 = pneg %p62
        $region30: #{tpu_custom_call.1} parent=27 // pred_check_branch
          %190 = sbr.rel (%p188) target = $region32
        $region31: #{tpu_custom_call.1} parent=27 // pred_region
          %191 = dma.done %s184, 2048
        $region32: #{tpu_custom_call.1} parent=27 // pred_fallthru
          _
        // Predicated region
        $region33: #{tpu_custom_call.1} parent=27 // pred_check
          %p192 = pneg %p90
        $region34: #{tpu_custom_call.1} parent=27 // pred_check_branch
          %194 = sbr.rel (%p192) target = $region36
        $region35: #{tpu_custom_call.1} parent=27 // pred_region
          %195 = dma.done [#allocation7], 2048
        $region36: #{tpu_custom_call.1} parent=27 // pred_fallthru
          _
        %s196 = sand.u32 %s49, 1
        %s197 = scalar_lea.sflag [#allocation4], %s196
        %s198 = sand.u32 %s49, 1
        %s199 = smul.addr %s198, 128
        %s200 = scalar_lea.vmem [#allocation3], %s199
        %p201 = pneg %p62
        %p202 = pneg %p59
        %p203 = pneg %p90
        %p204 = pneg %p87
        %p205 = pneg %p118
        %p206 = pneg %p115
        %s207 = sand.u32 %s105, 1
        %s208 = scalar_lea.sflag [#allocation5], %s207
        %s209 = sand.u32 %s105, 1
        %s210 = smul.addr %s209, 128
        %s211 = scalar_lea.vmem [#allocation8], %s210
        %s212 = smul.u32 16, %s25
        %s213 = smul.u32 16, %s27
        %s214 = smul.u32 16, %s25
        %p215 = scmp.eq.s32.totalorder %s27, 0
        // Predicated region
        $region37: #{tpu_custom_call.1} parent=27 // pred_check
          %p216 = pneg %p215
        $region38: #{tpu_custom_call.1} parent=27 // pred_check_branch
          %218 = sbr.rel (%p216) target = $region40
        $region39: #{tpu_custom_call.1} parent=27 // pred_region
          %219 = vst [vmem:[#allocation2] sm:$0xff] 0.0
          %220 = vst [vmem:[#allocation2 + $0x8] sm:$0xff] 0.0
          %221 = vst [vmem:[#allocation2 + $0x10] sm:$0xff] 0.0
          %222 = vst [vmem:[#allocation2 + $0x18] sm:$0xff] 0.0
          %223 = vst [vmem:[#allocation2 + $0x20] sm:$0xff] 0.0
          %224 = vst [vmem:[#allocation2 + $0x28] sm:$0xff] 0.0
          %225 = vst [vmem:[#allocation2 + $0x30] sm:$0xff] 0.0
          %226 = vst [vmem:[#allocation2 + $0x38] sm:$0xff] 0.0
          %227 = vst [vmem:[#allocation2 + $0x40] sm:$0xff] 0.0
          %228 = vst [vmem:[#allocation2 + $0x48] sm:$0xff] 0.0
          %229 = vst [vmem:[#allocation2 + $0x50] sm:$0xff] 0.0
          %230 = vst [vmem:[#allocation2 + $0x58] sm:$0xff] 0.0
          %231 = vst [vmem:[#allocation2 + $0x60] sm:$0xff] 0.0
          %232 = vst [vmem:[#allocation2 + $0x68] sm:$0xff] 0.0
          %233 = vst [vmem:[#allocation2 + $0x70] sm:$0xff] 0.0
          %234 = vst [vmem:[#allocation2 + $0x78] sm:$0xff] 0.0
        $region40: #{tpu_custom_call.1} parent=27 // pred_fallthru
          _
        %v235 = vld [vmem:[#allocation2] sm:$0xff]
        %v236 = vld [vmem:[#allocation2 + $0x8] sm:$0xff]
        %v237 = vld [vmem:[#allocation2 + $0x10] sm:$0xff]
        %v238 = vld [vmem:[#allocation2 + $0x18] sm:$0xff]
        %v239 = vld [vmem:[#allocation2 + $0x20] sm:$0xff]
        %v240 = vld [vmem:[#allocation2 + $0x28] sm:$0xff]
        %v241 = vld [vmem:[#allocation2 + $0x30] sm:$0xff]
        %v242 = vld [vmem:[#allocation2 + $0x38] sm:$0xff]
        %v243 = vld [vmem:[#allocation2 + $0x40] sm:$0xff]
        %v244 = vld [vmem:[#allocation2 + $0x48] sm:$0xff]
        %v245 = vld [vmem:[#allocation2 + $0x50] sm:$0xff]
        %v246 = vld [vmem:[#allocation2 + $0x58] sm:$0xff]
        %v247 = vld [vmem:[#allocation2 + $0x60] sm:$0xff]
        %v248 = vld [vmem:[#allocation2 + $0x68] sm:$0xff]
        %v249 = vld [vmem:[#allocation2 + $0x70] sm:$0xff]
        %v250 = vld [vmem:[#allocation2 + $0x78] sm:$0xff]
        %v251 = vld [vmem:[%s187] sm:$0xff]
        %v252 = vld [vmem:[%s187 + $0x8] sm:$0xff]
        %v253 = vld [vmem:[%s187 + $0x10] sm:$0xff]
        %v254 = vld [vmem:[%s187 + $0x18] sm:$0xff]
        %v255 = vld [vmem:[%s187 + $0x20] sm:$0xff]
        %v256 = vld [vmem:[%s187 + $0x28] sm:$0xff]
        %v257 = vld [vmem:[%s187 + $0x30] sm:$0xff]
        %v258 = vld [vmem:[%s187 + $0x38] sm:$0xff]
        %v259 = vld [vmem:[%s187 + $0x40] sm:$0xff]
        %v260 = vld [vmem:[%s187 + $0x48] sm:$0xff]
        %v261 = vld [vmem:[%s187 + $0x50] sm:$0xff]
        %v262 = vld [vmem:[%s187 + $0x58] sm:$0xff]
        %v263 = vld [vmem:[%s187 + $0x60] sm:$0xff]
        %v264 = vld [vmem:[%s187 + $0x68] sm:$0xff]
        %v265 = vld [vmem:[%s187 + $0x70] sm:$0xff]
        %v266 = vld [vmem:[%s187 + $0x78] sm:$0xff]
        %v267 = vld [vmem:[#allocation6] sm:$0xff]
        %v268 = vld [vmem:[#allocation6 + $0x8] sm:$0xff]
        %v269 = vld [vmem:[#allocation6 + $0x10] sm:$0xff]
        %v270 = vld [vmem:[#allocation6 + $0x18] sm:$0xff]
        %v271 = vld [vmem:[#allocation6 + $0x20] sm:$0xff]
        %v272 = vld [vmem:[#allocation6 + $0x28] sm:$0xff]
        %v273 = vld [vmem:[#allocation6 + $0x30] sm:$0xff]
        %v274 = vld [vmem:[#allocation6 + $0x38] sm:$0xff]
        %v275 = vld [vmem:[#allocation6 + $0x40] sm:$0xff]
        %v276 = vld [vmem:[#allocation6 + $0x48] sm:$0xff]
        %v277 = vld [vmem:[#allocation6 + $0x50] sm:$0xff]
        %v278 = vld [vmem:[#allocation6 + $0x58] sm:$0xff]
        %v279 = vld [vmem:[#allocation6 + $0x60] sm:$0xff]
        %v280 = vld [vmem:[#allocation6 + $0x68] sm:$0xff]
        %v281 = vld [vmem:[#allocation6 + $0x70] sm:$0xff]
        %v282 = vld [vmem:[#allocation6 + $0x78] sm:$0xff]
        %283 = vmatprep.subr.mxu0 0.0
        %284 = vmatpush1.msra.mxu0 %v267
        %285 = vmatprep.subr.mxu0 0.0
        %286 = vmatpush1.msra.mxu0 %v268
        %287 = vmatprep.subr.mxu0 0.0
        %288 = vmatpush1.msra.mxu0 %v269
        %289 = vmatprep.subr.mxu0 0.0
        %290 = vmatpush1.msra.mxu0 %v270
        %291 = vmatprep.subr.mxu0 0.0
        %292 = vmatpush1.msra.mxu0 %v271
        %293 = vmatprep.subr.mxu0 0.0
        %294 = vmatpush1.msra.mxu0 %v272
        %295 = vmatprep.subr.mxu0 0.0
        %296 = vmatpush1.msra.mxu0 %v273
        %297 = vmatprep.subr.mxu0 0.0
        %298 = vmatpush1.msra.mxu0 %v274
        %299 = vmatprep.subr.mxu0 0.0
        %300 = vmatpush1.msra.mxu0 %v275
        %301 = vmatprep.subr.mxu0 0.0
        %302 = vmatpush1.msra.mxu0 %v276
        %303 = vmatprep.subr.mxu0 0.0
        %304 = vmatpush1.msra.mxu0 %v277
        %305 = vmatprep.subr.mxu0 0.0
        %306 = vmatpush1.msra.mxu0 %v278
        %307 = vmatprep.subr.mxu0 0.0
        %308 = vmatpush1.msra.mxu0 %v279
        %309 = vmatprep.subr.mxu0 0.0
        %310 = vmatpush1.msra.mxu0 %v280
        %311 = vmatprep.subr.mxu0 0.0
        %312 = vmatpush1.msra.mxu0 %v281
        %313 = vmatprep.subr.mxu0 0.0
        %314 = vmatpush1.msra.mxu0 %v282
        %315 = vmatprep.subr.mxu0 0.0
        %316 = vmatpush1.msra.mxu0 0.0
        %317 = vmatprep.subr.mxu0 0.0
        %318 = vmatpush1.msra.mxu0 0.0
        %319 = vmatprep.subr.mxu0 0.0
        %320 = vmatpush1.msra.mxu0 0.0
        %321 = vmatprep.subr.mxu0 0.0
        %322 = vmatpush1.msra.mxu0 0.0
        %323 = vmatprep.subr.mxu0 0.0
        %324 = vmatpush1.msra.mxu0 0.0
        %325 = vmatprep.subr.mxu0 0.0
        %326 = vmatpush1.msra.mxu0 0.0
        %327 = vmatprep.subr.mxu0 0.0
        %328 = vmatpush1.msra.mxu0 0.0
        %329 = vmatprep.subr.mxu0 0.0
        %330 = vmatpush1.msra.mxu0 0.0
        %331 = vmatprep.subr.mxu0 0.0
        %332 = vmatpush1.msra.mxu0 0.0
        %333 = vmatprep.subr.mxu0 0.0
        %334 = vmatpush1.msra.mxu0 0.0
        %335 = vmatprep.subr.mxu0 0.0
        %336 = vmatpush1.msra.mxu0 0.0
        %337 = vmatprep.subr.mxu0 0.0
        %338 = vmatpush1.msra.mxu0 0.0
        %339 = vmatprep.subr.mxu0 0.0
        %340 = vmatpush1.msra.mxu0 0.0
        %341 = vmatprep.subr.mxu0 0.0
        %342 = vmatpush1.msra.mxu0 0.0
        %343 = vmatprep.subr.mxu0 0.0
        %344 = vmatpush1.msra.mxu0 0.0
        %345 = vmatprep.subr.mxu0 0.0
        %346 = vmatpush1.msra.mxu0 0.0
        %347 = vmatprep.mubr.f32.mxu0 0.0
        %348 = vmatmul.mubr.f32.gmra.mrb[0].mxu0 %v251
        %v349 = vpop.f32.mrb[0].mxu0
        %v350 = vadd.f32 0.0, %v349
        %v351 = vpop.f32.mrb[0].mxu0
        %352 = vmatprep.mubr.f32.mxu0 0.0
        %353 = vmatmul.mubr.f32.gmra.mrb[0].mxu0 %v252
        %v354 = vpop.f32.mrb[0].mxu0
        %v355 = vadd.f32 0.0, %v354
        %v356 = vpop.f32.mrb[0].mxu0
        %357 = vmatprep.mubr.f32.mxu0 0.0
        %358 = vmatmul.mubr.f32.gmra.mrb[0].mxu0 %v253
        %v359 = vpop.f32.mrb[0].mxu0
        %v360 = vadd.f32 0.0, %v359
        %v361 = vpop.f32.mrb[0].mxu0
        %362 = vmatprep.mubr.f32.mxu0 0.0
        %363 = vmatmul.mubr.f32.gmra.mrb[0].mxu0 %v254
        %v364 = vpop.f32.mrb[0].mxu0
        %v365 = vadd.f32 0.0, %v364
        %v366 = vpop.f32.mrb[0].mxu0
        %367 = vmatprep.mubr.f32.mxu0 0.0
        %368 = vmatmul.mubr.f32.gmra.mrb[0].mxu0 %v255
        %v369 = vpop.f32.mrb[0].mxu0
        %v370 = vadd.f32 0.0, %v369
        %v371 = vpop.f32.mrb[0].mxu0
        %372 = vmatprep.mubr.f32.mxu0 0.0
        %373 = vmatmul.mubr.f32.gmra.mrb[0].mxu0 %v256
        %v374 = vpop.f32.mrb[0].mxu0
        %v375 = vadd.f32 0.0, %v374
        %v376 = vpop.f32.mrb[0].mxu0
        %377 = vmatprep.mubr.f32.mxu0 0.0
        %378 = vmatmul.mubr.f32.gmra.mrb[0].mxu0 %v257
        %v379 = vpop.f32.mrb[0].mxu0
        %v380 = vadd.f32 0.0, %v379
        %v381 = vpop.f32.mrb[0].mxu0
        %382 = vmatprep.mubr.f32.mxu0 0.0
        %383 = vmatmul.mubr.f32.gmra.mrb[0].mxu0 %v258
        %v384 = vpop.f32.mrb[0].mxu0
        %v385 = vadd.f32 0.0, %v384
        %v386 = vpop.f32.mrb[0].mxu0
        %387 = vmatprep.mubr.f32.mxu0 0.0
        %388 = vmatmul.mubr.f32.gmra.mrb[0].mxu0 %v259
        %v389 = vpop.f32.mrb[0].mxu0
        %v390 = vadd.f32 0.0, %v389
        %v391 = vpop.f32.mrb[0].mxu0
        %392 = vmatprep.mubr.f32.mxu0 0.0
        %393 = vmatmul.mubr.f32.gmra.mrb[0].mxu0 %v260
        %v394 = vpop.f32.mrb[0].mxu0
        %v395 = vadd.f32 0.0, %v394
        %v396 = vpop.f32.mrb[0].mxu0
        %397 = vmatprep.mubr.f32.mxu0 0.0
        %398 = vmatmul.mubr.f32.gmra.mrb[0].mxu0 %v261
        %v399 = vpop.f32.mrb[0].mxu0
        %v400 = vadd.f32 0.0, %v399
        %v401 = vpop.f32.mrb[0].mxu0
        %402 = vmatprep.mubr.f32.mxu0 0.0
        %403 = vmatmul.mubr.f32.gmra.mrb[0].mxu0 %v262
        %v404 = vpop.f32.mrb[0].mxu0
        %v405 = vadd.f32 0.0, %v404
        %v406 = vpop.f32.mrb[0].mxu0
        %407 = vmatprep.mubr.f32.mxu0 0.0
        %408 = vmatmul.mubr.f32.gmra.mrb[0].mxu0 %v263
        %v409 = vpop.f32.mrb[0].mxu0
        %v410 = vadd.f32 0.0, %v409
        %v411 = vpop.f32.mrb[0].mxu0
        %412 = vmatprep.mubr.f32.mxu0 0.0
        %413 = vmatmul.mubr.f32.gmra.mrb[0].mxu0 %v264
        %v414 = vpop.f32.mrb[0].mxu0
        %v415 = vadd.f32 0.0, %v414
        %v416 = vpop.f32.mrb[0].mxu0
        %417 = vmatprep.mubr.f32.mxu0 0.0
        %418 = vmatmul.mubr.f32.gmra.mrb[0].mxu0 %v265
        %v419 = vpop.f32.mrb[0].mxu0
        %v420 = vadd.f32 0.0, %v419
        %v421 = vpop.f32.mrb[0].mxu0
        %422 = vmatprep.mubr.f32.mxu0 0.0
        %423 = vmatmul.mubr.f32.gmra.mrb[0].mxu0 %v266
        %v424 = vpop.f32.mrb[0].mxu0
        %v425 = vadd.f32 0.0, %v424
        %v426 = vpop.f32.mrb[0].mxu0
        %427 = vdwg.mxu0
        %v428 = vadd.f32 %v235, %v350
        %v429 = vadd.f32 %v236, %v355
        %v430 = vadd.f32 %v237, %v360
        %v431 = vadd.f32 %v238, %v365
        %v432 = vadd.f32 %v239, %v370
        %v433 = vadd.f32 %v240, %v375
        %v434 = vadd.f32 %v241, %v380
        %v435 = vadd.f32 %v242, %v385
        %v436 = vadd.f32 %v243, %v390
        %v437 = vadd.f32 %v244, %v395
        %v438 = vadd.f32 %v245, %v400
        %v439 = vadd.f32 %v246, %v405
        %v440 = vadd.f32 %v247, %v410
        %v441 = vadd.f32 %v248, %v415
        %v442 = vadd.f32 %v249, %v420
        %v443 = vadd.f32 %v250, %v425
        %444 = vst [vmem:[#allocation2] sm:$0xff] %v428
        %445 = vst [vmem:[#allocation2 + $0x8] sm:$0xff] %v429
        %446 = vst [vmem:[#allocation2 + $0x10] sm:$0xff] %v430
        %447 = vst [vmem:[#allocation2 + $0x18] sm:$0xff] %v431
        %448 = vst [vmem:[#allocation2 + $0x20] sm:$0xff] %v432
        %449 = vst [vmem:[#allocation2 + $0x28] sm:$0xff] %v433
        %450 = vst [vmem:[#allocation2 + $0x30] sm:$0xff] %v434
        %451 = vst [vmem:[#allocation2 + $0x38] sm:$0xff] %v435
        %452 = vst [vmem:[#allocation2 + $0x40] sm:$0xff] %v436
        %453 = vst [vmem:[#allocation2 + $0x48] sm:$0xff] %v437
        %454 = vst [vmem:[#allocation2 + $0x50] sm:$0xff] %v438
        %455 = vst [vmem:[#allocation2 + $0x58] sm:$0xff] %v439
        %456 = vst [vmem:[#allocation2 + $0x60] sm:$0xff] %v440
        %457 = vst [vmem:[#allocation2 + $0x68] sm:$0xff] %v441
        %458 = vst [vmem:[#allocation2 + $0x70] sm:$0xff] %v442
        %459 = vst [vmem:[#allocation2 + $0x78] sm:$0xff] %v443
        // Predicated region
        $region41: #{tpu_custom_call.1} parent=27 // pred_check
          %p460 = pneg %p215
        $region42: #{tpu_custom_call.1} parent=27 // pred_check_branch
          %462 = sbr.rel (%p460) target = $region44
        $region43: #{tpu_custom_call.1} parent=27 // pred_region
          %v463 = vld [vmem:[#allocation2] sm:$0xff]
          %v464 = vld [vmem:[#allocation2 + $0x8] sm:$0xff]
          %v465 = vld [vmem:[#allocation2 + $0x10] sm:$0xff]
          %v466 = vld [vmem:[#allocation2 + $0x18] sm:$0xff]
          %v467 = vld [vmem:[#allocation2 + $0x20] sm:$0xff]
          %v468 = vld [vmem:[#allocation2 + $0x28] sm:$0xff]
          %v469 = vld [vmem:[#allocation2 + $0x30] sm:$0xff]
          %v470 = vld [vmem:[#allocation2 + $0x38] sm:$0xff]
          %v471 = vld [vmem:[#allocation2 + $0x40] sm:$0xff]
          %v472 = vld [vmem:[#allocation2 + $0x48] sm:$0xff]
          %v473 = vld [vmem:[#allocation2 + $0x50] sm:$0xff]
          %v474 = vld [vmem:[#allocation2 + $0x58] sm:$0xff]
          %v475 = vld [vmem:[#allocation2 + $0x60] sm:$0xff]
          %v476 = vld [vmem:[#allocation2 + $0x68] sm:$0xff]
          %v477 = vld [vmem:[#allocation2 + $0x70] sm:$0xff]
          %v478 = vld [vmem:[#allocation2 + $0x78] sm:$0xff]
          %479 = vst [vmem:[%s211] sm:$0xff] %v463
          %480 = vst [vmem:[%s211 + $0x8] sm:$0xff] %v464
          %481 = vst [vmem:[%s211 + $0x10] sm:$0xff] %v465
          %482 = vst [vmem:[%s211 + $0x18] sm:$0xff] %v466
          %483 = vst [vmem:[%s211 + $0x20] sm:$0xff] %v467
          %484 = vst [vmem:[%s211 + $0x28] sm:$0xff] %v468
          %485 = vst [vmem:[%s211 + $0x30] sm:$0xff] %v469
          %486 = vst [vmem:[%s211 + $0x38] sm:$0xff] %v470
          %487 = vst [vmem:[%s211 + $0x40] sm:$0xff] %v471
          %488 = vst [vmem:[%s211 + $0x48] sm:$0xff] %v472
          %489 = vst [vmem:[%s211 + $0x50] sm:$0xff] %v473
          %490 = vst [vmem:[%s211 + $0x58] sm:$0xff] %v474
          %491 = vst [vmem:[%s211 + $0x60] sm:$0xff] %v475
          %492 = vst [vmem:[%s211 + $0x68] sm:$0xff] %v476
          %493 = vst [vmem:[%s211 + $0x70] sm:$0xff] %v477
          %494 = vst [vmem:[%s211 + $0x78] sm:$0xff] %v478
        $region44: #{tpu_custom_call.1} parent=27 // pred_fallthru
          _
        %s495 = sand.u32 %s105, 1
        %s496 = scalar_lea.sflag [#allocation5], %s495
        %s497 = sand.u32 %s105, 1
        %s498 = smul.addr %s497, 128
        %s499 = scalar_lea.vmem [#allocation8], %s498
        // Predicated region
        $region45: #{tpu_custom_call.1} parent=27 // pred_check
          %p500 = pneg %p115
        $region46: #{tpu_custom_call.1} parent=27 // pred_check_branch
          %502 = sbr.rel (%p500) target = $region48
        $region47: #{tpu_custom_call.1} parent=27 // pred_region
          %s503 = smul.u32 16, %s25
          %s505 = ssub.s32 2048, 2048
          %506 = vsyncadd %s496, %s505
          %s507 = sadd.s32 %s26, %s503
          %s508 = smul.addr %s507, 128
          %s509 = scalar_lea.hbm %s2, %s508
          %s510 = sshll.u32 %s499, 4
          %s511 = int_to_ptr.vmem [resolvable:$true] %s510
          %516 = dma.vmem_to_hbm [thread:$0]  %s511, 2048, %s509, %s496, 128, 128, 8
        $region48: #{tpu_custom_call.1} parent=27 // pred_fallthru
          _
      $region28: #{tpu_custom_call.1} parent=5 // pred_fallthru
        _
      %p517 = scmp.le.s32.totalorder 2, %s15
      // Predicated region
      $region49: #{tpu_custom_call.1} parent=5 // pred_check
        %p518 = pneg %p517
      $region50: #{tpu_custom_call.1} parent=5 // pred_check_branch
        %520 = sbr.rel (%p518) target = $region52
      $region51: #{tpu_custom_call.1} parent=5 // pred_region
        %s521 = ssub.s32 %s15, 2
        // Predicated region
        $region53: #{tpu_custom_call.1} parent=51 // pred_check
          %p522 = pneg %p121
        $region54: #{tpu_custom_call.1} parent=51 // pred_check_branch
          %524 = sbr.rel (%p522) target = $region56
        $region55: #{tpu_custom_call.1} parent=51 // pred_region
          %s525 = sand.u32 %s106, 1
          %s526 = scalar_lea.sflag [#allocation5], %s525
          %s527 = sand.u32 %s106, 1
          %s528 = smul.addr %s527, 128
          %s529 = scalar_lea.vmem [#allocation8], %s528
          %530 = dma.done %s526, 2048
        $region56: #{tpu_custom_call.1} parent=51 // pred_fallthru
          _
      $region52: #{tpu_custom_call.1} parent=5 // pred_fallthru
        _
    $region6: #{tpu_custom_call.1} parent=1 // loop_footer
      %s19 = sadd.s32 1, %s15
    $region7: #{tpu_custom_call.1} parent=1 // loop_footer_branch
      %14 = sbr.rel target = $region3
    $region8: #{tpu_custom_call.1} parent=1 // loop_exit
      _
    %531 = vsyncpa [#allocation4], 1
    %s532 = scalar_lea.sflag [#allocation4], 1
    %533 = vsyncpa %s532, 1
    %534 = vsyncpa [#allocation7], 1
    %535 = vsyncpa [#allocation5], 1
    %s536 = scalar_lea.sflag [#allocation5], 1
    %537 = vsyncpa %s536, 1

</llo_original>
